<compile_context>
chip_gen: v6e
topology: v6e:2x2x1
jax: 0.10.0
libtpu: 0.0.40
codegen_flags: <defaults>
</compile_context>

<pallas_src>
import functools
import math

import jax
import jax.numpy as jnp
from jax.experimental import pallas as pl
from jax.experimental.pallas import tpu as pltpu


def _rmsnorm_kernel(x_ref, w_ref, o_ref, *, eps):
    # Upcast to f32, mean-of-squares over hidden, rsqrt-normalize, downcast to
    # the input dtype (PyTorch's `.to(input_dtype)`), then scale by the weight.
    x_in = x_ref[...]                                    # (tile_rows, H)
    x = x_in.astype(jnp.float32)
    variance = jnp.mean(x * x, axis=-1, keepdims=True)   # (tile_rows, 1) f32
    normed = (x * jax.lax.rsqrt(variance + eps)).astype(x_in.dtype)
    # weight * input-dtype normed -> promoted in-kernel, cast to o_ref.dtype.
    o_ref[...] = (w_ref[...] * normed).astype(o_ref.dtype)


def _sublane_pack(dtype):
    # Rows per packed vreg sublane group: 8 for 32-bit, 16 for 16-bit, 32 for 8-bit.
    return max(8, 32 // jnp.dtype(dtype).itemsize)


def _round_up(n, m):
    return ((n + m - 1) // m) * m


def _vmem_params():
    """Generation-aware (tile_budget_bytes, vmem_limit_bytes)."""
    cap = None
    try:
        cap = pltpu.get_tpu_info().vmem_capacity_bytes
    except Exception:
        cap = None
    if cap is None:
        cap = 64 * 1024 * 1024  # assume the smallest current part (v7x)
    if cap >= 96 * 1024 * 1024:
        # v5e / v6e: 128 MiB per TensorCore -> spend most of it on big tiles.
        return 72 * 1024 * 1024, 104 * 1024 * 1024
    # v7x: 64 MiB per TensorCore -> leave headroom for Mosaic internal scratch.
    return 26 * 1024 * 1024, 52 * 1024 * 1024


def _choose_tile_rows(rows, H, x_itemsize, out_itemsize, pack, budget,
                      min_steps=8):
    # Per-row VMEM cost: double-buffered input + output tiles plus ~8 B/elem of
    # live f32 temporaries in the kernel body (x^2 / normalize fuse).
    per_row = H * (2 * x_itemsize + 2 * out_itemsize + 8)
    auto = max(pack, int(budget // max(per_row, 1)))
    auto = max(pack, (auto // pack) * pack)
    if rows <= min(auto, pack * min_steps):
        # Small input: one block covering all rows (a full-extent block is
        # always legal even if not a multiple of the sublane pack).
        return rows
    # Cap the tile so the grid has >= ~min_steps steps: keeps the software
    # pipeline full and lets the ("parallel",) axis shard across v7x's 2 TCs.
    tile_for_steps = max(pack, _round_up(pl.cdiv(rows, min_steps), pack))
    return max(pack, min(auto, tile_for_steps))


def qwen3_moe_rmsnorm(hidden_states, weight, eps=1e-6, *, tile_rows=None,
                      out_dtype=None):
    """RMSNorm matching Qwen3MoeRMSNorm.forward semantics.

    hidden_states: [..., H], weight: [H].
    Default output dtype = promote(weight.dtype, x.dtype), exactly like
    `weight * hidden_states.to(input_dtype)` in PyTorch.  Pass out_dtype=
    (e.g. bf16) to avoid the f32-promoted store for bf16 activations.
    """
    orig_shape = hidden_states.shape
    H = orig_shape[-1]
    rows = math.prod(orig_shape[:-1]) if len(orig_shape) > 1 else 1
    x2d = hidden_states.reshape(rows, H)

    if out_dtype is None:
        out_dtype = jnp.promote_types(weight.dtype, hidden_states.dtype)
    out_dtype = jnp.dtype(out_dtype)
    # If the caller narrows the output, narrow the resident weight too so the
    # in-kernel multiply / store stay in the narrow dtype.
    w2d = weight.astype(out_dtype).reshape(1, H)

    pack = _sublane_pack(hidden_states.dtype)
    x_itemsize = jnp.dtype(hidden_states.dtype).itemsize
    out_itemsize = out_dtype.itemsize
    budget, vmem_limit = _vmem_params()

    if tile_rows is None:
        tile_rows = _choose_tile_rows(rows, H, x_itemsize, out_itemsize, pack,
                                      budget)
    tile_rows = max(1, min(int(tile_rows), rows))
    if tile_rows < rows:
        # Multi-block: align the row tile to the sublane pack; the last block
        # may be ragged (pl.cdiv grid + boundary masking handles it).
        tile_rows = max(pack, (tile_rows // pack) * pack)
    grid = pl.cdiv(rows, tile_rows)

    # Edge-case safety (very large H): make sure the limit covers the
    # double-buffered tiles even at the pack-row floor.
    needed = (tile_rows * H * (2 * x_itemsize + 2 * out_itemsize)
              + H * out_itemsize + (4 << 20))
    vmem_limit = max(vmem_limit, needed)

    kernel = functools.partial(_rmsnorm_kernel, eps=eps)
    out2d = pl.pallas_call(
        kernel,
        out_shape=jax.ShapeDtypeStruct((rows, H), out_dtype),
        grid_spec=pltpu.PrefetchScalarGridSpec(
            num_scalar_prefetch=0,
            grid=(grid,),
            in_specs=[
                pl.BlockSpec((tile_rows, H), lambda i: (i, 0)),
                pl.BlockSpec((1, H), lambda i: (0, 0)),   # weight stays resident
            ],
            out_specs=pl.BlockSpec((tile_rows, H), lambda i: (i, 0)),
        ),
        compiler_params=pltpu.CompilerParams(
            dimension_semantics=("parallel",),
            vmem_limit_bytes=int(vmem_limit),
        ),
    )(x2d, w2d)
    return out2d.reshape(orig_shape)


def _reference(x, weight, eps):
    xf = x.astype(jnp.float32)
    var = jnp.mean(xf * xf, axis=-1, keepdims=True)
    return weight * (xf * jax.lax.rsqrt(var + eps)).astype(x.dtype)


if __name__ == "__main__":
    eps = 1e-6
    key = jax.random.PRNGKey(0)
    k1, k2 = jax.random.split(key)

    # Test 1: small shapes consistent with the module (batch=2, seq=8, H=128),
    # f32 activations, weight initialized to ones (as in the nn.Module).
    batch, seq, hidden = 2, 8, 128
    x = jax.random.normal(k1, (batch, seq, hidden), dtype=jnp.float32)
    weight = jnp.ones((hidden,), dtype=jnp.float32)
    out = qwen3_moe_rmsnorm(x, weight, eps=eps)
    out = jax.block_until_ready(out)
    ref = _reference(x, weight, eps)
    assert out.shape == x.shape and out.dtype == ref.dtype
    assert jnp.allclose(out, ref, atol=1e-5, rtol=1e-5)

    # Test 2: bf16 activations, row count not divisible by the tile
    # (exercises the ragged multi-block path and sublane-pack alignment).
    b2, s2, h2 = 3, 37, 256
    xb = jax.random.normal(k2, (b2, s2, h2), dtype=jnp.float32).astype(jnp.bfloat16)
    wb = jnp.ones((h2,), dtype=jnp.float32)
    out2 = qwen3_moe_rmsnorm(xb, wb, eps=eps, tile_rows=32)
    out2 = jax.block_until_ready(out2)
    ref2 = _reference(xb, wb, eps)
    assert out2.shape == xb.shape and out2.dtype == ref2.dtype
    assert jnp.allclose(out2, ref2, atol=5e-2, rtol=5e-2)

    # Test 3: narrow-output path (bf16 store instead of f32-promoted store).
    out3 = qwen3_moe_rmsnorm(xb, wb, eps=eps, out_dtype=jnp.bfloat16)
    out3 = jax.block_until_ready(out3)
    assert out3.dtype == jnp.bfloat16
    assert jnp.allclose(out3.astype(jnp.float32), ref2.astype(jnp.float32),
                        atol=5e-2, rtol=5e-2)

    print("KERNEL_OK")
</pallas_src>

<mosaic_0001>
module attributes {stable_mosaic.version = 11 : i64} {
  func.func @_rmsnorm_kernel(%arg0: i32, %arg1: memref<16x128xf32, #tpu.memory_space<vmem>>, %arg2: memref<1x128xf32, #tpu.memory_space<vmem>>, %arg3: memref<16x128xf32, #tpu.memory_space<vmem>>) attributes {dimension_semantics = [#tpu.dimension_semantics<parallel>], iteration_bounds = array<i64: 1>, scalar_prefetch = 0 : i64, scratch_operands = 0 : i64, tpu.core_type = #tpu.core_type<tc>, window_params = [{transform_indices = @transform_0, window_bounds = array<i64: 16, 128>}, {pipeline_mode = #tpu.pipeline_mode<synchronous>, transform_indices = @transform_1, window_bounds = array<i64: 1, 128>}, {transform_indices = @transform_2, window_bounds = array<i64: 16, 128>}]} {
    %c0 = arith.constant 0 : index
    %c0_0 = arith.constant 0 : index
    %0 = vector.load %arg1[%c0, %c0_0] : memref<16x128xf32, #tpu.memory_space<vmem>>, vector<16x128xf32>
    %1 = arith.mulf %0, %0 : vector<16x128xf32>
    %cst = arith.constant dense<0.000000e+00> : vector<16xf32>
    %2 = vector.multi_reduction <add>, %1, %cst [1] : vector<16x128xf32> to vector<16xf32>
    %3 = vector.shape_cast %2 : vector<16xf32> to vector<16x1xf32>
    %cst_1 = arith.constant 1.280000e+02 : f32
    %4 = vector.broadcast %cst_1 : f32 to vector<16x1xf32>
    %5 = arith.divf %3, %4 : vector<16x1xf32>
    %cst_2 = arith.constant 9.99999997E-7 : f32
    %6 = vector.broadcast %cst_2 : f32 to vector<16x1xf32>
    %7 = arith.addf %5, %6 : vector<16x1xf32>
    %8 = math.rsqrt %7 : vector<16x1xf32>
    %9 = vector.broadcast %8 : vector<16x1xf32> to vector<16x128xf32>
    %10 = arith.mulf %0, %9 : vector<16x128xf32>
    %c0_3 = arith.constant 0 : index
    %c0_4 = arith.constant 0 : index
    %11 = vector.load %arg2[%c0_3, %c0_4] : memref<1x128xf32, #tpu.memory_space<vmem>>, vector<1x128xf32>
    %12 = vector.broadcast %11 : vector<1x128xf32> to vector<16x128xf32>
    %13 = arith.mulf %12, %10 : vector<16x128xf32>
    %c0_5 = arith.constant 0 : index
    %c0_6 = arith.constant 0 : index
    %14 = vector.load %arg3[%c0_5, %c0_6] : memref<16x128xf32, #tpu.memory_space<vmem>>, vector<16x128xf32>
    tpu.vector_store %arg3[%c0_5, %c0_6], %13 {strides = array<i32>} : memref<16x128xf32, #tpu.memory_space<vmem>>, vector<16x128xf32>,
    return
  }
  func.func @transform_0(%arg0: i32) -> (i32, i32) {
    %c0_i32 = arith.constant 0 : i32
    %c0_i32_0 = arith.constant 0 : i32
    return %arg0, %c0_i32 : i32, i32
  }
  func.func @transform_1(%arg0: i32) -> (i32, i32) {
    %c0_i32 = arith.constant 0 : i32
    %c0_i32_0 = arith.constant 0 : i32
    %c0_i32_1 = arith.constant 0 : i32
    return %c0_i32, %c0_i32_0 : i32, i32
  }
  func.func @transform_2(%arg0: i32) -> (i32, i32) {
    %c0_i32 = arith.constant 0 : i32
    %c0_i32_0 = arith.constant 0 : i32
    return %arg0, %c0_i32 : i32, i32
  }
}

</mosaic_0001>

<llo_original>
// kernel: tpu_custom_call.1
$region0: #{tpu_custom_call.1}
  #allocation0 [shape = 'u32[]', space=smem, size = 0x4, offset = 0x4, fixed_abs, tag = 'smem constant byte address 0x4 - core index']
  #allocation1 [shape = 'u32[144,128]{1,0:T(1,128)}', space=vmem, size = 0x12000, scoped, tag = 'internal scratch']
  %s0 = inlined_call_operand.hbm [shape: f32[16,128], index: 0, kind: input, shape index: {}]
  %s1 = inlined_call_operand.vmem [shape: f32[1,128], index: 1, kind: input, shape index: {}]
  %s2 = inlined_call_operand.hbm [shape: f32[16,128], index: 2, kind: output, shape index: {}]
  %s3 = sld [smem:[#allocation0]]
  $region22: #{tpu_custom_call.1} parent=0
    _
  %s5 = ssub.s32 1, %s3
  %s6 = scalar_select 0, %s5, %s3
  $region1: #{tpu_custom_call.1} parent=0
    #allocation2 [shape = 'u8[8192]{0}', space=vmem, size = 0x2000, scoped, tag = 'input window, operand 0, single buffered']
    #allocation3 [shape = 's32[1]{0}', space=sflag, size = 0x4, scoped, tag = 'scoped memory for tpu_custom_call.1']
    #allocation4 [shape = 's32[1]{0}', space=sflag, size = 0x4, scoped, tag = 'scoped memory for tpu_custom_call.1']
    #allocation5 [shape = 'u8[8192]{0}', space=vmem, size = 0x2000, scoped, tag = 'output window, operand 0, single buffered']
    %7 = vsyncpa [#allocation3], 0
    %8 = vsyncpa [#allocation4], 0
    // Predicated region
    $region2: #{tpu_custom_call.1} parent=1 // pred_check
      _
    $region3: #{tpu_custom_call.1} parent=1 // pred_check_branch
      %10 = sbr.rel (0) target = $region5
    $region4: #{tpu_custom_call.1} parent=1 // pred_region
      %s12 = ssub.s32 256, 256
      %13 = vsyncadd [#allocation3], %s12
      %s14 = sshll.u32 [#allocation2], 4
      %s15 = int_to_ptr.vmem [resolvable:$true] %s14
      %20 = dma.hbm_to_vmem [thread:$0]  %s0, 256, %s15, [#allocation3], 128, 128, 8
    $region5: #{tpu_custom_call.1} parent=1 // pred_fallthru
      _
    // Predicated region
    $region6: #{tpu_custom_call.1} parent=1 // pred_check
      _
    $region7: #{tpu_custom_call.1} parent=1 // pred_check_branch
      %22 = sbr.rel (0) target = $region9
    $region8: #{tpu_custom_call.1} parent=1 // pred_region
      _
    $region9: #{tpu_custom_call.1} parent=1 // pred_fallthru
      _
    // Predicated region
    $region10: #{tpu_custom_call.1} parent=1 // pred_check
      _
    $region11: #{tpu_custom_call.1} parent=1 // pred_check_branch
      %24 = sbr.rel (0) target = $region13
    $region12: #{tpu_custom_call.1} parent=1 // pred_region
      %25 = dma.done [#allocation3], 256
    $region13: #{tpu_custom_call.1} parent=1 // pred_fallthru
      _
    %v26 = vld [vmem:[#allocation2] sm:$0xff]
    %v27 = vld [vmem:[#allocation2 + $0x8] sm:$0xff]
    %v28 = vmul.f32 %v26, %v26
    %v29 = vmul.f32 %v27, %v27
    %30 = vadd.xlane.f32.xlu0 %v28
    %v31 = vpop.xlane.xlu0 %30
    %32 = vadd.xlane.f32.xlu0 %v29
    %v33 = vpop.xlane.xlu0 %32
    %v34 = vrcp.pop 128.0
    %v35 = vmul.f32 %v31, %v34
    %v36 = vmul.f32 %v33, %v34
    %v37 = vadd.f32 %v35, 1e-06
    %v38 = vadd.f32 %v36, 1e-06
    %v39 = vrsqrt.pop %v37
    %v40 = vrsqrt.pop %v38
    %v41 = vmul.f32 %v26, %v39
    %v42 = vmul.f32 %v27, %v40
    %v43 = vld [vmem:[%s1] sm:$0x1]
    %v45 = vlaneseq
    %v46 = vshrl.u32 %v45, 7
    %v47 = vsub.s32 0, %v46
    %v48 = vrot.slane %v43, %v47
    %v50 = vmul.f32 %v48, %v41
    %v51 = vmul.f32 %v48, %v42
    %52 = vst [vmem:[#allocation5] sm:$0xff] %v50
    %53 = vst [vmem:[#allocation5 + $0x8] sm:$0xff] %v51
    // Predicated region
    $region14: #{tpu_custom_call.1} parent=1 // pred_check
      _
    $region15: #{tpu_custom_call.1} parent=1 // pred_check_branch
      %55 = sbr.rel (0) target = $region17
    $region16: #{tpu_custom_call.1} parent=1 // pred_region
      %s57 = ssub.s32 256, 256
      %58 = vsyncadd [#allocation4], %s57
      %s59 = sshll.u32 [#allocation5], 4
      %s60 = int_to_ptr.vmem [resolvable:$true] %s59
      %65 = dma.vmem_to_hbm [thread:$0]  %s60, 256, %s2, [#allocation4], 128, 128, 8
    $region17: #{tpu_custom_call.1} parent=1 // pred_fallthru
      _
    // Predicated region
    $region18: #{tpu_custom_call.1} parent=1 // pred_check
      _
    $region19: #{tpu_custom_call.1} parent=1 // pred_check_branch
      %67 = sbr.rel (0) target = $region21
    $region20: #{tpu_custom_call.1} parent=1 // pred_region
      %68 = dma.done [#allocation4], 256
    $region21: #{tpu_custom_call.1} parent=1 // pred_fallthru
      _
    %69 = vsyncpa [#allocation3], 1
    %70 = vsyncpa [#allocation4], 1

</llo_original>
